<compile_context>
chip_gen: v5e
topology: v5e:2x2
jax: 0.10.0
libtpu: 0.0.40
codegen_flags: <defaults>
</compile_context>

<pallas_src>
import functools

import jax
import jax.numpy as jnp
from jax.experimental import pallas as pl
from jax.experimental.pallas import tpu as pltpu


def _round_up(n, m):
    return ((n + m - 1) // m) * m


# ---------------------------------------------------------------------------
# Fused Pallas kernel: embedding + L x (Linear + ReLU) + per-tile mean pool
# ---------------------------------------------------------------------------
def _cnn_net1_kernel(x_ref, pool_ref, emb_w_ref, emb_b_ref, lw_ref, lb_ref,
                     o_ref, *, num_layers):
    # x_ref:     (TM, K_pad)   bf16  node-feature tile
    # pool_ref:  (G_pad, TM)   bf16  mean-pool matrix tile (rows / node counts)
    # emb_w_ref: (K_pad, D)    bf16  resident across grid steps
    # emb_b_ref: (1, D)        f32
    # lw_ref:    (L, D, D)     bf16  resident across grid steps
    # lb_ref:    (L, 1, D)     f32
    # o_ref:     (G_pad, D)    f32   partial pooled sum for this node tile
    h = (jnp.dot(x_ref[...], emb_w_ref[...],
                 preferred_element_type=jnp.float32) + emb_b_ref[...])

    # Hidden stack (has_bn=False, residual=False): Linear + ReLU per layer.
    # Static unrolled loop over layers; bf16 operands, f32 accumulation.
    for layer in range(num_layers):
        h = (jnp.dot(h.astype(jnp.bfloat16), lw_ref[layer],
                     preferred_element_type=jnp.float32) + lb_ref[layer])
        h = jnp.maximum(h, 0.0)

    # Per-tile partial of the global mean pool as an MXU matmul with the
    # precomputed (G_pad, TM) pooling tile (zero columns for padded nodes).
    o_ref[...] = jnp.dot(pool_ref[...], h.astype(jnp.bfloat16),
                         preferred_element_type=jnp.float32)


def cnn_net1_forward(params, x_pad, pool_mat_pad, *, tm=256):
    """x_pad: (N_pad, K_pad) f32, pool_mat_pad: (G_pad, N_pad) f32."""
    n_pad, k_pad = x_pad.shape
    g_pad = pool_mat_pad.shape[0]
    num_layers, _, d = params["layer_w"].shape
    in_dim = params["emb_w"].shape[0]
    assert n_pad % tm == 0
    num_tiles = n_pad // tm

    # bf16 operands for the MXU (accumulation stays f32 inside the kernel);
    # biases stay f32.  Embedding weight is zero-padded along K to match x_pad
    # (numerically exact).
    x_b = x_pad.astype(jnp.bfloat16)
    pool_b = pool_mat_pad.astype(jnp.bfloat16)
    emb_w_b = jnp.pad(params["emb_w"],
                      ((0, k_pad - in_dim), (0, 0))).astype(jnp.bfloat16)
    emb_b = params["emb_b"].astype(jnp.float32)
    layer_w_b = params["layer_w"].astype(jnp.bfloat16)
    layer_b = params["layer_b"].astype(jnp.float32)

    flops = 2 * n_pad * (k_pad * d + num_layers * d * d) + 2 * g_pad * n_pad * d
    bytes_accessed = (x_b.size * 2 + pool_b.size * 2 + emb_w_b.size * 2
                      + emb_b.size * 4 + layer_w_b.size * 2 + layer_b.size * 4
                      + num_tiles * g_pad * d * 4)

    kernel = functools.partial(_cnn_net1_kernel, num_layers=num_layers)
    partials = pl.pallas_call(
        kernel,
        out_shape=jax.ShapeDtypeStruct((num_tiles, g_pad, d), jnp.float32),
        grid=(num_tiles,),
        in_specs=[
            pl.BlockSpec((tm, k_pad), lambda i: (i, 0)),             # x tile
            pl.BlockSpec((g_pad, tm), lambda i: (0, i)),             # pool tile
            pl.BlockSpec((k_pad, d), lambda i: (0, 0)),              # emb_w
            pl.BlockSpec((1, d), lambda i: (0, 0)),                  # emb_b
            pl.BlockSpec((num_layers, d, d), lambda i: (0, 0, 0)),   # layer_w
            pl.BlockSpec((num_layers, 1, d), lambda i: (0, 0, 0)),   # layer_b
        ],
        out_specs=pl.BlockSpec((None, g_pad, d), lambda i: (i, 0, 0)),
        compiler_params=pltpu.CompilerParams(
            dimension_semantics=("parallel",),
            vmem_limit_bytes=16 * 1024 * 1024),
        cost_estimate=pl.CostEstimate(flops=flops, transcendentals=0,
                                      bytes_accessed=bytes_accessed),
    )(x_b, pool_b, emb_w_b, emb_b, layer_w_b, layer_b)

    # Node tiles are independent ("parallel"); reduce their partial pooled
    # sums with a cheap trailing XLA op.
    return jnp.sum(partials, axis=0)            # (G_pad, D)


# ---------------------------------------------------------------------------
# Deterministic parameter init (mirrors PyTorch Linear default init bounds);
# weights are stored pre-transposed as (in, out) so the kernel does x @ W + b.
# ---------------------------------------------------------------------------
def _linear_init(key, fan_in, fan_out):
    k1, k2 = jax.random.split(key)
    bound = 1.0 / jnp.sqrt(jnp.float32(fan_in))
    w = jax.random.uniform(k1, (fan_in, fan_out), jnp.float32, -bound, bound)
    b = jax.random.uniform(k2, (1, fan_out), jnp.float32, -bound, bound)
    return w, b


def init_params(key, in_dim=64, hidden_dims=(128, 128, 128, 128)):
    keys = jax.random.split(key, 1 + len(hidden_dims))
    emb_w, emb_b = _linear_init(keys[0], in_dim, hidden_dims[0])
    lws, lbs = [], []
    d_in = hidden_dims[0]
    for li, d_out in enumerate(hidden_dims):
        w, b = _linear_init(keys[1 + li], d_in, d_out)
        lws.append(w)
        lbs.append(b)
        d_in = d_out
    # All hidden dims equal -> stack as (L, D, D) / (L, 1, D)
    return dict(emb_w=emb_w, emb_b=emb_b,
                layer_w=jnp.stack(lws, axis=0), layer_b=jnp.stack(lbs, axis=0))


# ---------------------------------------------------------------------------
# Pure-JAX references for correctness checks
# ---------------------------------------------------------------------------
def reference_forward_f32(params, x, batch, num_graphs):
    hp = jax.lax.Precision.HIGHEST
    h = jnp.dot(x, params["emb_w"], precision=hp) + params["emb_b"]
    for layer in range(params["layer_w"].shape[0]):
        h = jnp.maximum(jnp.dot(h, params["layer_w"][layer], precision=hp)
                        + params["layer_b"][layer], 0.0)
    counts = jax.ops.segment_sum(jnp.ones((x.shape[0],), jnp.float32),
                                 batch, num_graphs)
    return jax.ops.segment_sum(h, batch, num_graphs) / counts[:, None]


def reference_forward_bf16(params, x, pool_mat):
    # Mirrors the kernel's numerics: bf16 matmul operands, f32 accumulation.
    hp = jax.lax.Precision.HIGHEST
    bf = lambda a: a.astype(jnp.bfloat16).astype(jnp.float32)
    h = jnp.dot(bf(x), bf(params["emb_w"]), precision=hp) + params["emb_b"]
    for layer in range(params["layer_w"].shape[0]):
        h = jnp.maximum(
            jnp.dot(bf(h), bf(params["layer_w"][layer]), precision=hp)
            + params["layer_b"][layer], 0.0)
    return jnp.dot(bf(pool_mat), bf(h), precision=hp)


# ---------------------------------------------------------------------------
if __name__ == "__main__":
    in_dim = 64
    hidden_dims = (128, 128, 128, 128)
    num_graphs = 2
    nodes_per_graph = 32
    N = num_graphs * nodes_per_graph
    TM = 256      # node tile: multiple of 256 fills the v6e/v7x MXU M dimension
    G_PAD = 8     # pad graphs to a full sublane -> unmasked output stores
    K_PAD = 128   # pad in_dim so the embedding contraction fills the MXU

    key = jax.random.PRNGKey(0)
    k_param, k_x = jax.random.split(key, 2)
    params = init_params(k_param, in_dim, hidden_dims)

    x = jax.random.normal(k_x, (N, in_dim), jnp.float32)
    batch = jnp.repeat(jnp.arange(num_graphs), nodes_per_graph)

    # TODO(synk): `global_pool_1` is not defined in the provided snippet;
    # assumed global mean pooling per graph (implemented as pool_mat @ h).
    counts = jnp.full((num_graphs,), float(nodes_per_graph), jnp.float32)
    pool_mat = (jax.nn.one_hot(batch, num_graphs, dtype=jnp.float32).T
                / counts[:, None])                              # (G, N)

    # Pad: nodes -> multiple of TM, feature K -> 128, graphs -> 8.
    # Padded node rows are ignored by the zero pool-matrix columns.
    n_pad = _round_up(N, TM)
    x_pad = jnp.pad(x, ((0, n_pad - N), (0, K_PAD - in_dim)))          # (256, 128)
    pool_mat_pad = jnp.pad(pool_mat,
                           ((0, G_PAD - num_graphs), (0, n_pad - N)))  # (8, 256)

    fwd = jax.jit(functools.partial(cnn_net1_forward, tm=TM))
    hg_pad = jax.block_until_ready(fwd(params, x_pad, pool_mat_pad))
    hg = hg_pad[:num_graphs]
    assert hg.shape == (num_graphs, hidden_dims[-1])

    # Tight check against a reference with the same bf16-operand numerics.
    ref_bf16 = reference_forward_bf16(params, x, pool_mat)
    err_bf16 = float(jnp.max(jnp.abs(hg - ref_bf16)))
    assert err_bf16 < 2e-3, f"mismatch vs bf16-input reference: {err_bf16}"

    # Looser check against the true f32 module semantics.
    ref_f32 = reference_forward_f32(params, x, batch, num_graphs)
    err_f32 = float(jnp.max(jnp.abs(hg - ref_f32)))
    assert err_f32 < 5e-2, f"mismatch vs f32 reference: {err_f32}"

    print("KERNEL_OK")
</pallas_src>

<mosaic_0001>
module attributes {stable_mosaic.version = 11 : i64} {
  func.func @_cnn_net1_kernel(%arg0: i32, %arg1: memref<256x128xbf16, #tpu.memory_space<vmem>>, %arg2: memref<8x256xbf16, #tpu.memory_space<vmem>>, %arg3: memref<128x128xbf16, #tpu.memory_space<vmem>>, %arg4: memref<1x128xf32, #tpu.memory_space<vmem>>, %arg5: memref<4x128x128xbf16, #tpu.memory_space<vmem>>, %arg6: memref<4x1x128xf32, #tpu.memory_space<vmem>>, %arg7: memref<1x8x128xf32, #tpu.memory_space<vmem>>) attributes {dimension_semantics = [#tpu.dimension_semantics<parallel>], iteration_bounds = array<i64: 1>, scalar_prefetch = 0 : i64, scratch_operands = 0 : i64, tpu.core_type = #tpu.core_type<tc>, window_params = [{transform_indices = @transform_0, window_bounds = array<i64: 256, 128>}, {transform_indices = @transform_1, window_bounds = array<i64: 8, 256>}, {pipeline_mode = #tpu.pipeline_mode<synchronous>, transform_indices = @transform_2, window_bounds = array<i64: 128, 128>}, {pipeline_mode = #tpu.pipeline_mode<synchronous>, transform_indices = @transform_3, window_bounds = array<i64: 1, 128>}, {pipeline_mode = #tpu.pipeline_mode<synchronous>, transform_indices = @transform_4, window_bounds = array<i64: 4, 128, 128>}, {pipeline_mode = #tpu.pipeline_mode<synchronous>, transform_indices = @transform_5, window_bounds = array<i64: 4, 1, 128>}, {transform_indices = @transform_6, window_bounds = array<i64: 1, 8, 128>}]} {
    %c0 = arith.constant 0 : index
    %c0_0 = arith.constant 0 : index
    %0 = vector.load %arg1[%c0, %c0_0] : memref<256x128xbf16, #tpu.memory_space<vmem>>, vector<256x128xbf16>
    %c0_1 = arith.constant 0 : index
    %c0_2 = arith.constant 0 : index
    %1 = vector.load %arg3[%c0_1, %c0_2] : memref<128x128xbf16, #tpu.memory_space<vmem>>, vector<128x128xbf16>
    %cst = arith.constant dense<0.000000e+00> : vector<256x128xf32>
    %2 = tpu.matmul %0, %1, %cst {dimension_numbers = #tpu.dot_dimension_numbers<[1], [0], [0], [1], [0, 0, 1, 1], [], []>} : vector<256x128xbf16>, vector<128x128xbf16>, vector<256x128xf32> -> vector<256x128xf32>
    %c0_3 = arith.constant 0 : index
    %c0_4 = arith.constant 0 : index
    %3 = vector.load %arg4[%c0_3, %c0_4] : memref<1x128xf32, #tpu.memory_space<vmem>>, vector<1x128xf32>
    %4 = vector.broadcast %3 : vector<1x128xf32> to vector<256x128xf32>
    %5 = arith.addf %2, %4 : vector<256x128xf32>
    %6 = arith.truncf %5 : vector<256x128xf32> to vector<256x128xbf16>
    %c0_5 = arith.constant 0 : index
    %c0_6 = arith.constant 0 : index
    %c0_7 = arith.constant 0 : index
    %7 = vector.load %arg5[%c0_5, %c0_6, %c0_7] : memref<4x128x128xbf16, #tpu.memory_space<vmem>>, vector<1x128x128xbf16>
    %8 = vector.shape_cast %7 : vector<1x128x128xbf16> to vector<128x128xbf16>
    %cst_8 = arith.constant dense<0.000000e+00> : vector<256x128xf32>
    %9 = tpu.matmul %6, %8, %cst_8 {dimension_numbers = #tpu.dot_dimension_numbers<[1], [0], [0], [1], [0, 0, 1, 1], [], []>} : vector<256x128xbf16>, vector<128x128xbf16>, vector<256x128xf32> -> vector<256x128xf32>
    %c0_9 = arith.constant 0 : index
    %c0_10 = arith.constant 0 : index
    %c0_11 = arith.constant 0 : index
    %10 = vector.load %arg6[%c0_9, %c0_10, %c0_11] : memref<4x1x128xf32, #tpu.memory_space<vmem>>, vector<1x1x128xf32>
    %11 = vector.shape_cast %10 : vector<1x1x128xf32> to vector<1x128xf32>
    %12 = vector.broadcast %11 : vector<1x128xf32> to vector<256x128xf32>
    %13 = arith.addf %9, %12 : vector<256x128xf32>
    %cst_12 = arith.constant 0.000000e+00 : f32
    %14 = vector.broadcast %cst_12 : f32 to vector<256x128xf32>
    %15 = arith.maximumf %13, %14 : vector<256x128xf32>
    %16 = arith.truncf %15 : vector<256x128xf32> to vector<256x128xbf16>
    %c1 = arith.constant 1 : index
    %c0_13 = arith.constant 0 : index
    %c0_14 = arith.constant 0 : index
    %17 = vector.load %arg5[%c1, %c0_13, %c0_14] : memref<4x128x128xbf16, #tpu.memory_space<vmem>>, vector<1x128x128xbf16>
    %18 = vector.shape_cast %17 : vector<1x128x128xbf16> to vector<128x128xbf16>
    %cst_15 = arith.constant dense<0.000000e+00> : vector<256x128xf32>
    %19 = tpu.matmul %16, %18, %cst_15 {dimension_numbers = #tpu.dot_dimension_numbers<[1], [0], [0], [1], [0, 0, 1, 1], [], []>} : vector<256x128xbf16>, vector<128x128xbf16>, vector<256x128xf32> -> vector<256x128xf32>
    %c1_16 = arith.constant 1 : index
    %c0_17 = arith.constant 0 : index
    %c0_18 = arith.constant 0 : index
    %20 = vector.load %arg6[%c1_16, %c0_17, %c0_18] : memref<4x1x128xf32, #tpu.memory_space<vmem>>, vector<1x1x128xf32>
    %21 = vector.shape_cast %20 : vector<1x1x128xf32> to vector<1x128xf32>
    %22 = vector.broadcast %21 : vector<1x128xf32> to vector<256x128xf32>
    %23 = arith.addf %19, %22 : vector<256x128xf32>
    %cst_19 = arith.constant 0.000000e+00 : f32
    %24 = vector.broadcast %cst_19 : f32 to vector<256x128xf32>
    %25 = arith.maximumf %23, %24 : vector<256x128xf32>
    %26 = arith.truncf %25 : vector<256x128xf32> to vector<256x128xbf16>
    %c2 = arith.constant 2 : index
    %c0_20 = arith.constant 0 : index
    %c0_21 = arith.constant 0 : index
    %27 = vector.load %arg5[%c2, %c0_20, %c0_21] : memref<4x128x128xbf16, #tpu.memory_space<vmem>>, vector<1x128x128xbf16>
    %28 = vector.shape_cast %27 : vector<1x128x128xbf16> to vector<128x128xbf16>
    %cst_22 = arith.constant dense<0.000000e+00> : vector<256x128xf32>
    %29 = tpu.matmul %26, %28, %cst_22 {dimension_numbers = #tpu.dot_dimension_numbers<[1], [0], [0], [1], [0, 0, 1, 1], [], []>} : vector<256x128xbf16>, vector<128x128xbf16>, vector<256x128xf32> -> vector<256x128xf32>
    %c2_23 = arith.constant 2 : index
    %c0_24 = arith.constant 0 : index
    %c0_25 = arith.constant 0 : index
    %30 = vector.load %arg6[%c2_23, %c0_24, %c0_25] : memref<4x1x128xf32, #tpu.memory_space<vmem>>, vector<1x1x128xf32>
    %31 = vector.shape_cast %30 : vector<1x1x128xf32> to vector<1x128xf32>
    %32 = vector.broadcast %31 : vector<1x128xf32> to vector<256x128xf32>
    %33 = arith.addf %29, %32 : vector<256x128xf32>
    %cst_26 = arith.constant 0.000000e+00 : f32
    %34 = vector.broadcast %cst_26 : f32 to vector<256x128xf32>
    %35 = arith.maximumf %33, %34 : vector<256x128xf32>
    %36 = arith.truncf %35 : vector<256x128xf32> to vector<256x128xbf16>
    %c3 = arith.constant 3 : index
    %c0_27 = arith.constant 0 : index
    %c0_28 = arith.constant 0 : index
    %37 = vector.load %arg5[%c3, %c0_27, %c0_28] : memref<4x128x128xbf16, #tpu.memory_space<vmem>>, vector<1x128x128xbf16>
    %38 = vector.shape_cast %37 : vector<1x128x128xbf16> to vector<128x128xbf16>
    %cst_29 = arith.constant dense<0.000000e+00> : vector<256x128xf32>
    %39 = tpu.matmul %36, %38, %cst_29 {dimension_numbers = #tpu.dot_dimension_numbers<[1], [0], [0], [1], [0, 0, 1, 1], [], []>} : vector<256x128xbf16>, vector<128x128xbf16>, vector<256x128xf32> -> vector<256x128xf32>
    %c3_30 = arith.constant 3 : index
    %c0_31 = arith.constant 0 : index
    %c0_32 = arith.constant 0 : index
    %40 = vector.load %arg6[%c3_30, %c0_31, %c0_32] : memref<4x1x128xf32, #tpu.memory_space<vmem>>, vector<1x1x128xf32>
    %41 = vector.shape_cast %40 : vector<1x1x128xf32> to vector<1x128xf32>
    %42 = vector.broadcast %41 : vector<1x128xf32> to vector<256x128xf32>
    %43 = arith.addf %39, %42 : vector<256x128xf32>
    %cst_33 = arith.constant 0.000000e+00 : f32
    %44 = vector.broadcast %cst_33 : f32 to vector<256x128xf32>
    %45 = arith.maximumf %43, %44 : vector<256x128xf32>
    %c0_34 = arith.constant 0 : index
    %c0_35 = arith.constant 0 : index
    %46 = vector.load %arg2[%c0_34, %c0_35] : memref<8x256xbf16, #tpu.memory_space<vmem>>, vector<8x256xbf16>
    %47 = arith.truncf %45 : vector<256x128xf32> to vector<256x128xbf16>
    %cst_36 = arith.constant dense<0.000000e+00> : vector<8x128xf32>
    %48 = tpu.matmul %46, %47, %cst_36 {dimension_numbers = #tpu.dot_dimension_numbers<[1], [0], [0], [1], [0, 0, 1, 1], [], []>} : vector<8x256xbf16>, vector<256x128xbf16>, vector<8x128xf32> -> vector<8x128xf32>
    %c0_37 = arith.constant 0 : index
    %c0_38 = arith.constant 0 : index
    %c0_39 = arith.constant 0 : index
    %49 = vector.load %arg7[%c0_37, %c0_38, %c0_39] : memref<1x8x128xf32, #tpu.memory_space<vmem>>, vector<1x8x128xf32>
    %50 = vector.shape_cast %49 : vector<1x8x128xf32> to vector<8x128xf32>
    %51 = vector.shape_cast %48 : vector<8x128xf32> to vector<1x8x128xf32>
    tpu.vector_store %arg7[%c0_37, %c0_38, %c0_39], %51 {strides = array<i32>} : memref<1x8x128xf32, #tpu.memory_space<vmem>>, vector<1x8x128xf32>,
    return
  }
  func.func @transform_0(%arg0: i32) -> (i32, i32) {
    %c0_i32 = arith.constant 0 : i32
    %c0_i32_0 = arith.constant 0 : i32
    return %arg0, %c0_i32 : i32, i32
  }
  func.func @transform_1(%arg0: i32) -> (i32, i32) {
    %c0_i32 = arith.constant 0 : i32
    %c0_i32_0 = arith.constant 0 : i32
    return %c0_i32, %arg0 : i32, i32
  }
  func.func @transform_2(%arg0: i32) -> (i32, i32) {
    %c0_i32 = arith.constant 0 : i32
    %c0_i32_0 = arith.constant 0 : i32
    %c0_i32_1 = arith.constant 0 : i32
    return %c0_i32, %c0_i32_0 : i32, i32
  }
  func.func @transform_3(%arg0: i32) -> (i32, i32) {
    %c0_i32 = arith.constant 0 : i32
    %c0_i32_0 = arith.constant 0 : i32
    %c0_i32_1 = arith.constant 0 : i32
    return %c0_i32, %c0_i32_0 : i32, i32
  }
  func.func @transform_4(%arg0: i32) -> (i32, i32, i32) {
    %c0_i32 = arith.constant 0 : i32
    %c0_i32_0 = arith.constant 0 : i32
    %c0_i32_1 = arith.constant 0 : i32
    %c0_i32_2 = arith.constant 0 : i32
    return %c0_i32, %c0_i32_0, %c0_i32_1 : i32, i32, i32
  }
  func.func @transform_5(%arg0: i32) -> (i32, i32, i32) {
    %c0_i32 = arith.constant 0 : i32
    %c0_i32_0 = arith.constant 0 : i32
    %c0_i32_1 = arith.constant 0 : i32
    %c0_i32_2 = arith.constant 0 : i32
    return %c0_i32, %c0_i32_0, %c0_i32_1 : i32, i32, i32
  }
  func.func @transform_6(%arg0: i32) -> (i32, i32, i32) {
    %c0_i32 = arith.constant 0 : i32
    %c0_i32_0 = arith.constant 0 : i32
    %c0_i32_1 = arith.constant 0 : i32
    return %arg0, %c0_i32, %c0_i32_0 : i32, i32, i32
  }
}

</mosaic_0001>

<llo_original>
// kernel: cnn_net1_forward.1
$region0: #{cnn_net1_forward.1}
  #allocation0 [shape = 'u32[]', space=smem, size = 0x4, offset = 0x4, fixed_abs, tag = 'smem constant byte address 0x4 - core index']
  #allocation1 [shape = 'u32[72,128]{1,0:T(1,128)}', space=vmem, size = 0x9000, scoped, tag = 'internal scratch']
  %s0 = inlined_call_operand.vmem [shape: bf16[256,128], index: 0, kind: input, shape index: {}]
  %s1 = inlined_call_operand.vmem [shape: bf16[8,256], index: 1, kind: input, shape index: {}]
  %s2 = inlined_call_operand.vmem [shape: bf16[128,128], index: 2, kind: input, shape index: {}]
  %s3 = inlined_call_operand.vmem [shape: f32[1,128], index: 3, kind: input, shape index: {}]
  %s4 = inlined_call_operand.vmem [shape: bf16[4,128,128], index: 4, kind: input, shape index: {}]
  %s5 = inlined_call_operand.vmem [shape: f32[4,1,128], index: 5, kind: input, shape index: {}]
  %s6 = inlined_call_operand.hbm [shape: f32[1,8,128], index: 6, kind: output, shape index: {}]
  %s7 = sld [smem:[#allocation0]]
  $region34: #{cnn_net1_forward.1} parent=0
    _
  %s9 = ssub.s32 1, %s7
  %s10 = scalar_select 0, %s9, %s7
  $region1: #{cnn_net1_forward.1} parent=0
    #allocation2 [shape = 'u8[4096]{0}', space=vmem, size = 0x1000, scoped, tag = 'output window, operand 0, single buffered']
    #allocation3 [shape = 's32[1]{0}', space=sflag, size = 0x4, scoped, tag = 'scoped memory for cnn_net1_forward.1']
    %11 = vsyncpa [#allocation3], 0
    // Predicated region
    $region2: #{cnn_net1_forward.1} parent=1 // pred_check
      _
    $region3: #{cnn_net1_forward.1} parent=1 // pred_check_branch
      %13 = sbr.rel (0) target = $region5
    $region4: #{cnn_net1_forward.1} parent=1 // pred_region
      _
    $region5: #{cnn_net1_forward.1} parent=1 // pred_fallthru
      _
    // Predicated region
    $region6: #{cnn_net1_forward.1} parent=1 // pred_check
      _
    $region7: #{cnn_net1_forward.1} parent=1 // pred_check_branch
      %15 = sbr.rel (0) target = $region9
    $region8: #{cnn_net1_forward.1} parent=1 // pred_region
      _
    $region9: #{cnn_net1_forward.1} parent=1 // pred_fallthru
      _
    // Predicated region
    $region10: #{cnn_net1_forward.1} parent=1 // pred_check
      _
    $region11: #{cnn_net1_forward.1} parent=1 // pred_check_branch
      %17 = sbr.rel (0) target = $region13
    $region12: #{cnn_net1_forward.1} parent=1 // pred_region
      _
    $region13: #{cnn_net1_forward.1} parent=1 // pred_fallthru
      _
    // Predicated region
    $region14: #{cnn_net1_forward.1} parent=1 // pred_check
      _
    $region15: #{cnn_net1_forward.1} parent=1 // pred_check_branch
      %19 = sbr.rel (0) target = $region17
    $region16: #{cnn_net1_forward.1} parent=1 // pred_region
      _
    $region17: #{cnn_net1_forward.1} parent=1 // pred_fallthru
      _
    // Predicated region
    $region18: #{cnn_net1_forward.1} parent=1 // pred_check
      _
    $region19: #{cnn_net1_forward.1} parent=1 // pred_check_branch
      %21 = sbr.rel (0) target = $region21
    $region20: #{cnn_net1_forward.1} parent=1 // pred_region
      _
    $region21: #{cnn_net1_forward.1} parent=1 // pred_fallthru
      _
    // Predicated region
    $region22: #{cnn_net1_forward.1} parent=1 // pred_check
      _
    $region23: #{cnn_net1_forward.1} parent=1 // pred_check_branch
      %23 = sbr.rel (0) target = $region25
    $region24: #{cnn_net1_forward.1} parent=1 // pred_region
      _
    $region25: #{cnn_net1_forward.1} parent=1 // pred_fallthru
      _
    %v24 = vld [vmem:[%s0] sm:$0xf]
    %v25 = vld [vmem:[%s0 + $0x4] sm:$0xf]
    %v26 = vld [vmem:[%s0 + $0x8] sm:$0xf]
    %v27 = vld [vmem:[%s0 + $0xc] sm:$0xf]
    %v28 = vld [vmem:[%s0 + $0x10] sm:$0xf]
    %v29 = vld [vmem:[%s0 + $0x14] sm:$0xf]
    %v30 = vld [vmem:[%s0 + $0x18] sm:$0xf]
    %v31 = vld [vmem:[%s0 + $0x1c] sm:$0xf]
    %v32 = vld [vmem:[%s0 + $0x20] sm:$0xf]
    %v33 = vld [vmem:[%s0 + $0x24] sm:$0xf]
    %v34 = vld [vmem:[%s0 + $0x28] sm:$0xf]
    %v35 = vld [vmem:[%s0 + $0x2c] sm:$0xf]
    %v36 = vld [vmem:[%s0 + $0x30] sm:$0xf]
    %v37 = vld [vmem:[%s0 + $0x34] sm:$0xf]
    %v38 = vld [vmem:[%s0 + $0x38] sm:$0xf]
    %v39 = vld [vmem:[%s0 + $0x3c] sm:$0xf]
    %v40 = vld [vmem:[%s0 + $0x40] sm:$0xf]
    %v41 = vld [vmem:[%s0 + $0x44] sm:$0xf]
    %v42 = vld [vmem:[%s0 + $0x48] sm:$0xf]
    %v43 = vld [vmem:[%s0 + $0x4c] sm:$0xf]
    %v44 = vld [vmem:[%s0 + $0x50] sm:$0xf]
    %v45 = vld [vmem:[%s0 + $0x54] sm:$0xf]
    %v46 = vld [vmem:[%s0 + $0x58] sm:$0xf]
    %v47 = vld [vmem:[%s0 + $0x5c] sm:$0xf]
    %v48 = vld [vmem:[%s0 + $0x60] sm:$0xf]
    %v49 = vld [vmem:[%s0 + $0x64] sm:$0xf]
    %v50 = vld [vmem:[%s0 + $0x68] sm:$0xf]
    %v51 = vld [vmem:[%s0 + $0x6c] sm:$0xf]
    %v52 = vld [vmem:[%s0 + $0x70] sm:$0xf]
    %v53 = vld [vmem:[%s0 + $0x74] sm:$0xf]
    %v54 = vld [vmem:[%s0 + $0x78] sm:$0xf]
    %v55 = vld [vmem:[%s0 + $0x7c] sm:$0xf]
    %v56 = vld [vmem:[%s2] sm:$0xf]
    %v57 = vld [vmem:[%s2 + $0x4] sm:$0xf]
    %v58 = vld [vmem:[%s2 + $0x8] sm:$0xf]
    %v59 = vld [vmem:[%s2 + $0xc] sm:$0xf]
    %v60 = vld [vmem:[%s2 + $0x10] sm:$0xf]
    %v61 = vld [vmem:[%s2 + $0x14] sm:$0xf]
    %v62 = vld [vmem:[%s2 + $0x18] sm:$0xf]
    %v63 = vld [vmem:[%s2 + $0x1c] sm:$0xf]
    %v64 = vld [vmem:[%s2 + $0x20] sm:$0xf]
    %v65 = vld [vmem:[%s2 + $0x24] sm:$0xf]
    %v66 = vld [vmem:[%s2 + $0x28] sm:$0xf]
    %v67 = vld [vmem:[%s2 + $0x2c] sm:$0xf]
    %v68 = vld [vmem:[%s2 + $0x30] sm:$0xf]
    %v69 = vld [vmem:[%s2 + $0x34] sm:$0xf]
    %v70 = vld [vmem:[%s2 + $0x38] sm:$0xf]
    %v71 = vld [vmem:[%s2 + $0x3c] sm:$0xf]
    %v72 = vld [vmem:[%s3] sm:$0x1]
    %v74 = vperm.slane %v72, 0
    %v108 = vunpack.c.l.b16 %v24
    %v109 = vunpack.c.l.b16 %v25
    %v110 = vunpack.c.l.b16 %v26
    %v111 = vunpack.c.l.b16 %v27
    %v112 = vunpack.c.l.b16 %v28
    %v113 = vunpack.c.l.b16 %v29
    %v114 = vunpack.c.l.b16 %v30
    %v115 = vunpack.c.l.b16 %v31
    %v116 = vunpack.c.l.b16 %v32
    %v117 = vunpack.c.l.b16 %v33
    %v118 = vunpack.c.l.b16 %v34
    %v119 = vunpack.c.l.b16 %v35
    %v120 = vunpack.c.l.b16 %v36
    %v121 = vunpack.c.l.b16 %v37
    %v122 = vunpack.c.l.b16 %v38
    %v123 = vunpack.c.l.b16 %v39
    %v124 = vunpack.c.l.b16 %v40
    %v125 = vunpack.c.l.b16 %v41
    %v126 = vunpack.c.l.b16 %v42
    %v127 = vunpack.c.l.b16 %v43
    %v128 = vunpack.c.l.b16 %v44
    %v129 = vunpack.c.l.b16 %v45
    %v130 = vunpack.c.l.b16 %v46
    %v131 = vunpack.c.l.b16 %v47
    %v132 = vunpack.c.l.b16 %v48
    %v133 = vunpack.c.l.b16 %v49
    %v134 = vunpack.c.l.b16 %v50
    %v135 = vunpack.c.l.b16 %v51
    %v136 = vunpack.c.l.b16 %v52
    %v137 = vunpack.c.l.b16 %v53
    %v138 = vunpack.c.l.b16 %v54
    %v139 = vunpack.c.l.b16 %v55
    %v140 = vpack.c.b16 %v109, %v108
    %v141 = vpack.c.b16 %v111, %v110
    %v142 = vpack.c.b16 %v113, %v112
    %v143 = vpack.c.b16 %v115, %v114
    %v144 = vpack.c.b16 %v117, %v116
    %v145 = vpack.c.b16 %v119, %v118
    %v146 = vpack.c.b16 %v121, %v120
    %v147 = vpack.c.b16 %v123, %v122
    %v148 = vpack.c.b16 %v125, %v124
    %v149 = vpack.c.b16 %v127, %v126
    %v150 = vpack.c.b16 %v129, %v128
    %v151 = vpack.c.b16 %v131, %v130
    %v152 = vpack.c.b16 %v133, %v132
    %v153 = vpack.c.b16 %v135, %v134
    %v154 = vpack.c.b16 %v137, %v136
    %v155 = vpack.c.b16 %v139, %v138
    %v188 = vunpack.c.l.b16 %v56
    %v189 = vunpack.c.l.b16 %v57
    %v190 = vunpack.c.l.b16 %v58
    %v191 = vunpack.c.l.b16 %v59
    %v192 = vunpack.c.l.b16 %v60
    %v193 = vunpack.c.l.b16 %v61
    %v194 = vunpack.c.l.b16 %v62
    %v195 = vunpack.c.l.b16 %v63
    %v196 = vunpack.c.l.b16 %v64
    %v197 = vunpack.c.l.b16 %v65
    %v198 = vunpack.c.l.b16 %v66
    %v199 = vunpack.c.l.b16 %v67
    %v200 = vunpack.c.l.b16 %v68
    %v201 = vunpack.c.l.b16 %v69
    %v202 = vunpack.c.l.b16 %v70
    %v203 = vunpack.c.l.b16 %v71
    %v204 = vpack.c.b16 %v189, %v188
    %v205 = vpack.c.b16 %v191, %v190
    %v206 = vpack.c.b16 %v193, %v192
    %v207 = vpack.c.b16 %v195, %v194
    %v208 = vpack.c.b16 %v197, %v196
    %v209 = vpack.c.b16 %v199, %v198
    %v210 = vpack.c.b16 %v201, %v200
    %v211 = vpack.c.b16 %v203, %v202
    %220 = vmatpush.bf16.msra.mxu0 %v211
    %221 = vmatpush.bf16.msra.mxu0 %v210
    %222 = vmatpush.bf16.msra.mxu0 %v209
    %223 = vmatpush.bf16.msra.mxu0 %v208
    %224 = vmatpush.bf16.msra.mxu0 %v207
    %225 = vmatpush.bf16.msra.mxu0 %v206
    %226 = vmatpush.bf16.msra.mxu0 %v205
    %227 = vmatpush.bf16.msra.mxu0 %v204
    %228 = vmatmul.bf16.gmra.mxu0 %v140
    %v229 = vpop.f32.mrf.mxu0
    %v230 = vadd.f32 %v74, %v229
    %v231 = vpop.f32.mrf.mxu0
    %v232 = vadd.f32 %v74, %v231
    %233 = vmatmul.bf16.gmra.mxu0 %v141
    %v234 = vpop.f32.mrf.mxu0
    %v235 = vadd.f32 %v74, %v234
    %v236 = vpop.f32.mrf.mxu0
    %v237 = vadd.f32 %v74, %v236
    %238 = vmatmul.bf16.gmra.mxu0 %v142
    %v239 = vpop.f32.mrf.mxu0
    %v240 = vadd.f32 %v74, %v239
    %v241 = vpop.f32.mrf.mxu0
    %v242 = vadd.f32 %v74, %v241
    %243 = vmatmul.bf16.gmra.mxu0 %v143
    %v244 = vpop.f32.mrf.mxu0
    %v245 = vadd.f32 %v74, %v244
    %v246 = vpop.f32.mrf.mxu0
    %v247 = vadd.f32 %v74, %v246
    %248 = vmatmul.bf16.gmra.mxu0 %v144
    %v249 = vpop.f32.mrf.mxu0
    %v250 = vadd.f32 %v74, %v249
    %v251 = vpop.f32.mrf.mxu0
    %v252 = vadd.f32 %v74, %v251
    %253 = vmatmul.bf16.gmra.mxu0 %v145
    %v254 = vpop.f32.mrf.mxu0
    %v255 = vadd.f32 %v74, %v254
    %v256 = vpop.f32.mrf.mxu0
    %v257 = vadd.f32 %v74, %v256
    %258 = vmatmul.bf16.gmra.mxu0 %v146
    %v259 = vpop.f32.mrf.mxu0
    %v260 = vadd.f32 %v74, %v259
    %v261 = vpop.f32.mrf.mxu0
    %v262 = vadd.f32 %v74, %v261
    %263 = vmatmul.bf16.gmra.mxu0 %v147
    %v264 = vpop.f32.mrf.mxu0
    %v265 = vadd.f32 %v74, %v264
    %v266 = vpop.f32.mrf.mxu0
    %v267 = vadd.f32 %v74, %v266
    %268 = vmatmul.bf16.gmra.mxu0 %v148
    %v269 = vpop.f32.mrf.mxu0
    %v270 = vadd.f32 %v74, %v269
    %v271 = vpop.f32.mrf.mxu0
    %v272 = vadd.f32 %v74, %v271
    %273 = vmatmul.bf16.gmra.mxu0 %v149
    %v274 = vpop.f32.mrf.mxu0
    %v275 = vadd.f32 %v74, %v274
    %v276 = vpop.f32.mrf.mxu0
    %v277 = vadd.f32 %v74, %v276
    %278 = vmatmul.bf16.gmra.mxu0 %v150
    %v279 = vpop.f32.mrf.mxu0
    %v280 = vadd.f32 %v74, %v279
    %v281 = vpop.f32.mrf.mxu0
    %v282 = vadd.f32 %v74, %v281
    %283 = vmatmul.bf16.gmra.mxu0 %v151
    %v284 = vpop.f32.mrf.mxu0
    %v285 = vadd.f32 %v74, %v284
    %v286 = vpop.f32.mrf.mxu0
    %v287 = vadd.f32 %v74, %v286
    %288 = vmatmul.bf16.gmra.mxu0 %v152
    %v289 = vpop.f32.mrf.mxu0
    %v290 = vadd.f32 %v74, %v289
    %v291 = vpop.f32.mrf.mxu0
    %v292 = vadd.f32 %v74, %v291
    %293 = vmatmul.bf16.gmra.mxu0 %v153
    %v294 = vpop.f32.mrf.mxu0
    %v295 = vadd.f32 %v74, %v294
    %v296 = vpop.f32.mrf.mxu0
    %v297 = vadd.f32 %v74, %v296
    %298 = vmatmul.bf16.gmra.mxu0 %v154
    %v299 = vpop.f32.mrf.mxu0
    %v300 = vadd.f32 %v74, %v299
    %v301 = vpop.f32.mrf.mxu0
    %v302 = vadd.f32 %v74, %v301
    %303 = vmatmul.bf16.gmra.mxu0 %v155
    %v304 = vpop.f32.mrf.mxu0
    %v305 = vadd.f32 %v74, %v304
    %v306 = vpop.f32.mrf.mxu0
    %v307 = vadd.f32 %v74, %v306
    %308 = vdwg.mxu0
    %v309 = vpack.c.bf16 %v232, %v230
    %v310 = vpack.c.bf16 %v237, %v235
    %v311 = vpack.c.bf16 %v242, %v240
    %v312 = vpack.c.bf16 %v247, %v245
    %v313 = vpack.c.bf16 %v252, %v250
    %v314 = vpack.c.bf16 %v257, %v255
    %v315 = vpack.c.bf16 %v262, %v260
    %v316 = vpack.c.bf16 %v267, %v265
    %v317 = vpack.c.bf16 %v272, %v270
    %v318 = vpack.c.bf16 %v277, %v275
    %v319 = vpack.c.bf16 %v282, %v280
    %v320 = vpack.c.bf16 %v287, %v285
    %v321 = vpack.c.bf16 %v292, %v290
    %v322 = vpack.c.bf16 %v297, %v295
    %v323 = vpack.c.bf16 %v302, %v300
    %v324 = vpack.c.bf16 %v307, %v305
    %v325 = vld [vmem:[%s4] sm:$0xf]
    %v326 = vld [vmem:[%s4 + $0x4] sm:$0xf]
    %v327 = vld [vmem:[%s4 + $0x8] sm:$0xf]
    %v328 = vld [vmem:[%s4 + $0xc] sm:$0xf]
    %v329 = vld [vmem:[%s4 + $0x10] sm:$0xf]
    %v330 = vld [vmem:[%s4 + $0x14] sm:$0xf]
    %v331 = vld [vmem:[%s4 + $0x18] sm:$0xf]
    %v332 = vld [vmem:[%s4 + $0x1c] sm:$0xf]
    %v333 = vld [vmem:[%s4 + $0x20] sm:$0xf]
    %v334 = vld [vmem:[%s4 + $0x24] sm:$0xf]
    %v335 = vld [vmem:[%s4 + $0x28] sm:$0xf]
    %v336 = vld [vmem:[%s4 + $0x2c] sm:$0xf]
    %v337 = vld [vmem:[%s4 + $0x30] sm:$0xf]
    %v338 = vld [vmem:[%s4 + $0x34] sm:$0xf]
    %v339 = vld [vmem:[%s4 + $0x38] sm:$0xf]
    %v340 = vld [vmem:[%s4 + $0x3c] sm:$0xf]
    %v341 = vld [vmem:[%s5] sm:$0x1]
    %v343 = vperm.slane %v341, 0
    %v361 = vunpack.c.l.b16 %v325
    %v362 = vunpack.c.l.b16 %v326
    %v363 = vunpack.c.l.b16 %v327
    %v364 = vunpack.c.l.b16 %v328
    %v365 = vunpack.c.l.b16 %v329
    %v366 = vunpack.c.l.b16 %v330
    %v367 = vunpack.c.l.b16 %v331
    %v368 = vunpack.c.l.b16 %v332
    %v369 = vunpack.c.l.b16 %v333
    %v370 = vunpack.c.l.b16 %v334
    %v371 = vunpack.c.l.b16 %v335
    %v372 = vunpack.c.l.b16 %v336
    %v373 = vunpack.c.l.b16 %v337
    %v374 = vunpack.c.l.b16 %v338
    %v375 = vunpack.c.l.b16 %v339
    %v376 = vunpack.c.l.b16 %v340
    %v377 = vpack.c.b16 %v362, %v361
    %v378 = vpack.c.b16 %v364, %v363
    %v379 = vpack.c.b16 %v366, %v365
    %v380 = vpack.c.b16 %v368, %v367
    %v381 = vpack.c.b16 %v370, %v369
    %v382 = vpack.c.b16 %v372, %v371
    %v383 = vpack.c.b16 %v374, %v373
    %v384 = vpack.c.b16 %v376, %v375
    %393 = vmatpush.bf16.msra.mxu0 %v384
    %394 = vmatpush.bf16.msra.mxu0 %v383
    %395 = vmatpush.bf16.msra.mxu0 %v382
    %396 = vmatpush.bf16.msra.mxu0 %v381
    %397 = vmatpush.bf16.msra.mxu0 %v380
    %398 = vmatpush.bf16.msra.mxu0 %v379
    %399 = vmatpush.bf16.msra.mxu0 %v378
    %400 = vmatpush.bf16.msra.mxu0 %v377
    %401 = vmatmul.bf16.gmra.mxu0 %v309
    %v402 = vpop.f32.mrf.mxu0
    %v403 = vadd.f32 %v343, %v402
    %v404 = vpop.f32.mrf.mxu0
    %v405 = vadd.f32 %v343, %v404
    %406 = vmatmul.bf16.gmra.mxu0 %v310
    %v407 = vpop.f32.mrf.mxu0
    %v408 = vadd.f32 %v343, %v407
    %v409 = vpop.f32.mrf.mxu0
    %v410 = vadd.f32 %v343, %v409
    %411 = vmatmul.bf16.gmra.mxu0 %v311
    %v412 = vpop.f32.mrf.mxu0
    %v413 = vadd.f32 %v343, %v412
    %v414 = vpop.f32.mrf.mxu0
    %v415 = vadd.f32 %v343, %v414
    %416 = vmatmul.bf16.gmra.mxu0 %v312
    %v417 = vpop.f32.mrf.mxu0
    %v418 = vadd.f32 %v343, %v417
    %v419 = vpop.f32.mrf.mxu0
    %v420 = vadd.f32 %v343, %v419
    %421 = vmatmul.bf16.gmra.mxu0 %v313
    %v422 = vpop.f32.mrf.mxu0
    %v423 = vadd.f32 %v343, %v422
    %v424 = vpop.f32.mrf.mxu0
    %v425 = vadd.f32 %v343, %v424
    %426 = vmatmul.bf16.gmra.mxu0 %v314
    %v427 = vpop.f32.mrf.mxu0
    %v428 = vadd.f32 %v343, %v427
    %v429 = vpop.f32.mrf.mxu0
    %v430 = vadd.f32 %v343, %v429
    %431 = vmatmul.bf16.gmra.mxu0 %v315
    %v432 = vpop.f32.mrf.mxu0
    %v433 = vadd.f32 %v343, %v432
    %v434 = vpop.f32.mrf.mxu0
    %v435 = vadd.f32 %v343, %v434
    %436 = vmatmul.bf16.gmra.mxu0 %v316
    %v437 = vpop.f32.mrf.mxu0
    %v438 = vadd.f32 %v343, %v437
    %v439 = vpop.f32.mrf.mxu0
    %v440 = vadd.f32 %v343, %v439
    %441 = vmatmul.bf16.gmra.mxu0 %v317
    %v442 = vpop.f32.mrf.mxu0
    %v443 = vadd.f32 %v343, %v442
    %v444 = vpop.f32.mrf.mxu0
    %v445 = vadd.f32 %v343, %v444
    %446 = vmatmul.bf16.gmra.mxu0 %v318
    %v447 = vpop.f32.mrf.mxu0
    %v448 = vadd.f32 %v343, %v447
    %v449 = vpop.f32.mrf.mxu0
    %v450 = vadd.f32 %v343, %v449
    %451 = vmatmul.bf16.gmra.mxu0 %v319
    %v452 = vpop.f32.mrf.mxu0
    %v453 = vadd.f32 %v343, %v452
    %v454 = vpop.f32.mrf.mxu0
    %v455 = vadd.f32 %v343, %v454
    %456 = vmatmul.bf16.gmra.mxu0 %v320
    %v457 = vpop.f32.mrf.mxu0
    %v458 = vadd.f32 %v343, %v457
    %v459 = vpop.f32.mrf.mxu0
    %v460 = vadd.f32 %v343, %v459
    %461 = vmatmul.bf16.gmra.mxu0 %v321
    %v462 = vpop.f32.mrf.mxu0
    %v463 = vadd.f32 %v343, %v462
    %v464 = vpop.f32.mrf.mxu0
    %v465 = vadd.f32 %v343, %v464
    %466 = vmatmul.bf16.gmra.mxu0 %v322
    %v467 = vpop.f32.mrf.mxu0
    %v468 = vadd.f32 %v343, %v467
    %v469 = vpop.f32.mrf.mxu0
    %v470 = vadd.f32 %v343, %v469
    %471 = vmatmul.bf16.gmra.mxu0 %v323
    %v472 = vpop.f32.mrf.mxu0
    %v473 = vadd.f32 %v343, %v472
    %v474 = vpop.f32.mrf.mxu0
    %v475 = vadd.f32 %v343, %v474
    %476 = vmatmul.bf16.gmra.mxu0 %v324
    %v477 = vpop.f32.mrf.mxu0
    %v478 = vadd.f32 %v343, %v477
    %v479 = vpop.f32.mrf.mxu0
    %v480 = vadd.f32 %v343, %v479
    %481 = vdwg.mxu0
    %v482 = vmax.f32 %v403, 0.0
    %v483 = vmax.f32 %v405, 0.0
    %v484 = vmax.f32 %v408, 0.0
    %v485 = vmax.f32 %v410, 0.0
    %v486 = vmax.f32 %v413, 0.0
    %v487 = vmax.f32 %v415, 0.0
    %v488 = vmax.f32 %v418, 0.0
    %v489 = vmax.f32 %v420, 0.0
    %v490 = vmax.f32 %v423, 0.0
    %v491 = vmax.f32 %v425, 0.0
    %v492 = vmax.f32 %v428, 0.0
    %v493 = vmax.f32 %v430, 0.0
    %v494 = vmax.f32 %v433, 0.0
    %v495 = vmax.f32 %v435, 0.0
    %v496 = vmax.f32 %v438, 0.0
    %v497 = vmax.f32 %v440, 0.0
    %v498 = vmax.f32 %v443, 0.0
    %v499 = vmax.f32 %v445, 0.0
    %v500 = vmax.f32 %v448, 0.0
    %v501 = vmax.f32 %v450, 0.0
    %v502 = vmax.f32 %v453, 0.0
    %v503 = vmax.f32 %v455, 0.0
    %v504 = vmax.f32 %v458, 0.0
    %v505 = vmax.f32 %v460, 0.0
    %v506 = vmax.f32 %v463, 0.0
    %v507 = vmax.f32 %v465, 0.0
    %v508 = vmax.f32 %v468, 0.0
    %v509 = vmax.f32 %v470, 0.0
    %v510 = vmax.f32 %v473, 0.0
    %v511 = vmax.f32 %v475, 0.0
    %v512 = vmax.f32 %v478, 0.0
    %v513 = vmax.f32 %v480, 0.0
    %v514 = vpack.c.bf16 %v483, %v482
    %v515 = vpack.c.bf16 %v485, %v484
    %v516 = vpack.c.bf16 %v487, %v486
    %v517 = vpack.c.bf16 %v489, %v488
    %v518 = vpack.c.bf16 %v491, %v490
    %v519 = vpack.c.bf16 %v493, %v492
    %v520 = vpack.c.bf16 %v495, %v494
    %v521 = vpack.c.bf16 %v497, %v496
    %v522 = vpack.c.bf16 %v499, %v498
    %v523 = vpack.c.bf16 %v501, %v500
    %v524 = vpack.c.bf16 %v503, %v502
    %v525 = vpack.c.bf16 %v505, %v504
    %v526 = vpack.c.bf16 %v507, %v506
    %v527 = vpack.c.bf16 %v509, %v508
    %v528 = vpack.c.bf16 %v511, %v510
    %v529 = vpack.c.bf16 %v513, %v512
    %s530 = scalar_lea.vmem %s4, 64
    %v531 = vld [vmem:[%s530] sm:$0xf]
    %v532 = vld [vmem:[%s530 + $0x4] sm:$0xf]
    %v533 = vld [vmem:[%s530 + $0x8] sm:$0xf]
    %v534 = vld [vmem:[%s530 + $0xc] sm:$0xf]
    %v535 = vld [vmem:[%s530 + $0x10] sm:$0xf]
    %v536 = vld [vmem:[%s530 + $0x14] sm:$0xf]
    %v537 = vld [vmem:[%s530 + $0x18] sm:$0xf]
    %v538 = vld [vmem:[%s530 + $0x1c] sm:$0xf]
    %v539 = vld [vmem:[%s530 + $0x20] sm:$0xf]
    %v540 = vld [vmem:[%s530 + $0x24] sm:$0xf]
    %v541 = vld [vmem:[%s530 + $0x28] sm:$0xf]
    %v542 = vld [vmem:[%s530 + $0x2c] sm:$0xf]
    %v543 = vld [vmem:[%s530 + $0x30] sm:$0xf]
    %v544 = vld [vmem:[%s530 + $0x34] sm:$0xf]
    %v545 = vld [vmem:[%s530 + $0x38] sm:$0xf]
    %v546 = vld [vmem:[%s530 + $0x3c] sm:$0xf]
    %s547 = scalar_lea.vmem %s5, 1
    %v548 = vld [vmem:[%s547] sm:$0x1]
    %v550 = vperm.slane %v548, 0
    %v568 = vunpack.c.l.b16 %v531
    %v569 = vunpack.c.l.b16 %v532
    %v570 = vunpack.c.l.b16 %v533
    %v571 = vunpack.c.l.b16 %v534
    %v572 = vunpack.c.l.b16 %v535
    %v573 = vunpack.c.l.b16 %v536
    %v574 = vunpack.c.l.b16 %v537
    %v575 = vunpack.c.l.b16 %v538
    %v576 = vunpack.c.l.b16 %v539
    %v577 = vunpack.c.l.b16 %v540
    %v578 = vunpack.c.l.b16 %v541
    %v579 = vunpack.c.l.b16 %v542
    %v580 = vunpack.c.l.b16 %v543
    %v581 = vunpack.c.l.b16 %v544
    %v582 = vunpack.c.l.b16 %v545
    %v583 = vunpack.c.l.b16 %v546
    %v584 = vpack.c.b16 %v569, %v568
    %v585 = vpack.c.b16 %v571, %v570
    %v586 = vpack.c.b16 %v573, %v572
    %v587 = vpack.c.b16 %v575, %v574
    %v588 = vpack.c.b16 %v577, %v576
    %v589 = vpack.c.b16 %v579, %v578
    %v590 = vpack.c.b16 %v581, %v580
    %v591 = vpack.c.b16 %v583, %v582
    %600 = vmatpush.bf16.msra.mxu0 %v591
    %601 = vmatpush.bf16.msra.mxu0 %v590
    %602 = vmatpush.bf16.msra.mxu0 %v589
    %603 = vmatpush.bf16.msra.mxu0 %v588
    %604 = vmatpush.bf16.msra.mxu0 %v587
    %605 = vmatpush.bf16.msra.mxu0 %v586
    %606 = vmatpush.bf16.msra.mxu0 %v585
    %607 = vmatpush.bf16.msra.mxu0 %v584
    %608 = vmatmul.bf16.gmra.mxu0 %v514
    %v609 = vpop.f32.mrf.mxu0
    %v610 = vadd.f32 %v550, %v609
    %v611 = vpop.f32.mrf.mxu0
    %v612 = vadd.f32 %v550, %v611
    %613 = vmatmul.bf16.gmra.mxu0 %v515
    %v614 = vpop.f32.mrf.mxu0
    %v615 = vadd.f32 %v550, %v614
    %v616 = vpop.f32.mrf.mxu0
    %v617 = vadd.f32 %v550, %v616
    %618 = vmatmul.bf16.gmra.mxu0 %v516
    %v619 = vpop.f32.mrf.mxu0
    %v620 = vadd.f32 %v550, %v619
    %v621 = vpop.f32.mrf.mxu0
    %v622 = vadd.f32 %v550, %v621
    %623 = vmatmul.bf16.gmra.mxu0 %v517
    %v624 = vpop.f32.mrf.mxu0
    %v625 = vadd.f32 %v550, %v624
    %v626 = vpop.f32.mrf.mxu0
    %v627 = vadd.f32 %v550, %v626
    %628 = vmatmul.bf16.gmra.mxu0 %v518
    %v629 = vpop.f32.mrf.mxu0
    %v630 = vadd.f32 %v550, %v629
    %v631 = vpop.f32.mrf.mxu0
    %v632 = vadd.f32 %v550, %v631
    %633 = vmatmul.bf16.gmra.mxu0 %v519
    %v634 = vpop.f32.mrf.mxu0
    %v635 = vadd.f32 %v550, %v634
    %v636 = vpop.f32.mrf.mxu0
    %v637 = vadd.f32 %v550, %v636
    %638 = vmatmul.bf16.gmra.mxu0 %v520
    %v639 = vpop.f32.mrf.mxu0
    %v640 = vadd.f32 %v550, %v639
    %v641 = vpop.f32.mrf.mxu0
    %v642 = vadd.f32 %v550, %v641
    %643 = vmatmul.bf16.gmra.mxu0 %v521
    %v644 = vpop.f32.mrf.mxu0
    %v645 = vadd.f32 %v550, %v644
    %v646 = vpop.f32.mrf.mxu0
    %v647 = vadd.f32 %v550, %v646
    %648 = vmatmul.bf16.gmra.mxu0 %v522
    %v649 = vpop.f32.mrf.mxu0
    %v650 = vadd.f32 %v550, %v649
    %v651 = vpop.f32.mrf.mxu0
    %v652 = vadd.f32 %v550, %v651
    %653 = vmatmul.bf16.gmra.mxu0 %v523
    %v654 = vpop.f32.mrf.mxu0
    %v655 = vadd.f32 %v550, %v654
    %v656 = vpop.f32.mrf.mxu0
    %v657 = vadd.f32 %v550, %v656
    %658 = vmatmul.bf16.gmra.mxu0 %v524
    %v659 = vpop.f32.mrf.mxu0
    %v660 = vadd.f32 %v550, %v659
    %v661 = vpop.f32.mrf.mxu0
    %v662 = vadd.f32 %v550, %v661
    %663 = vmatmul.bf16.gmra.mxu0 %v525
    %v664 = vpop.f32.mrf.mxu0
    %v665 = vadd.f32 %v550, %v664
    %v666 = vpop.f32.mrf.mxu0
    %v667 = vadd.f32 %v550, %v666
    %668 = vmatmul.bf16.gmra.mxu0 %v526
    %v669 = vpop.f32.mrf.mxu0
    %v670 = vadd.f32 %v550, %v669
    %v671 = vpop.f32.mrf.mxu0
    %v672 = vadd.f32 %v550, %v671
    %673 = vmatmul.bf16.gmra.mxu0 %v527
    %v674 = vpop.f32.mrf.mxu0
    %v675 = vadd.f32 %v550, %v674
    %v676 = vpop.f32.mrf.mxu0
    %v677 = vadd.f32 %v550, %v676
    %678 = vmatmul.bf16.gmra.mxu0 %v528
    %v679 = vpop.f32.mrf.mxu0
    %v680 = vadd.f32 %v550, %v679
    %v681 = vpop.f32.mrf.mxu0
    %v682 = vadd.f32 %v550, %v681
    %683 = vmatmul.bf16.gmra.mxu0 %v529
    %v684 = vpop.f32.mrf.mxu0
    %v685 = vadd.f32 %v550, %v684
    %v686 = vpop.f32.mrf.mxu0
    %v687 = vadd.f32 %v550, %v686
    %688 = vdwg.mxu0
    %v689 = vmax.f32 %v610, 0.0
    %v690 = vmax.f32 %v612, 0.0
    %v691 = vmax.f32 %v615, 0.0
    %v692 = vmax.f32 %v617, 0.0
    %v693 = vmax.f32 %v620, 0.0
    %v694 = vmax.f32 %v622, 0.0
    %v695 = vmax.f32 %v625, 0.0
    %v696 = vmax.f32 %v627, 0.0
    %v697 = vmax.f32 %v630, 0.0
    %v698 = vmax.f32 %v632, 0.0
    %v699 = vmax.f32 %v635, 0.0
    %v700 = vmax.f32 %v637, 0.0
    %v701 = vmax.f32 %v640, 0.0
    %v702 = vmax.f32 %v642, 0.0
    %v703 = vmax.f32 %v645, 0.0
    %v704 = vmax.f32 %v647, 0.0
    %v705 = vmax.f32 %v650, 0.0
    %v706 = vmax.f32 %v652, 0.0
    %v707 = vmax.f32 %v655, 0.0
    %v708 = vmax.f32 %v657, 0.0
    %v709 = vmax.f32 %v660, 0.0
    %v710 = vmax.f32 %v662, 0.0
    %v711 = vmax.f32 %v665, 0.0
    %v712 = vmax.f32 %v667, 0.0
    %v713 = vmax.f32 %v670, 0.0
    %v714 = vmax.f32 %v672, 0.0
    %v715 = vmax.f32 %v675, 0.0
    %v716 = vmax.f32 %v677, 0.0
    %v717 = vmax.f32 %v680, 0.0
    %v718 = vmax.f32 %v682, 0.0
    %v719 = vmax.f32 %v685, 0.0
    %v720 = vmax.f32 %v687, 0.0
    %v721 = vpack.c.bf16 %v690, %v689
    %v722 = vpack.c.bf16 %v692, %v691
    %v723 = vpack.c.bf16 %v694, %v693
    %v724 = vpack.c.bf16 %v696, %v695
    %v725 = vpack.c.bf16 %v698, %v697
    %v726 = vpack.c.bf16 %v700, %v699
    %v727 = vpack.c.bf16 %v702, %v701
    %v728 = vpack.c.bf16 %v704, %v703
    %v729 = vpack.c.bf16 %v706, %v705
    %v730 = vpack.c.bf16 %v708, %v707
    %v731 = vpack.c.bf16 %v710, %v709
    %v732 = vpack.c.bf16 %v712, %v711
    %v733 = vpack.c.bf16 %v714, %v713
    %v734 = vpack.c.bf16 %v716, %v715
    %v735 = vpack.c.bf16 %v718, %v717
    %v736 = vpack.c.bf16 %v720, %v719
    %s737 = scalar_lea.vmem %s4, 128
    %v738 = vld [vmem:[%s737] sm:$0xf]
    %v739 = vld [vmem:[%s737 + $0x4] sm:$0xf]
    %v740 = vld [vmem:[%s737 + $0x8] sm:$0xf]
    %v741 = vld [vmem:[%s737 + $0xc] sm:$0xf]
    %v742 = vld [vmem:[%s737 + $0x10] sm:$0xf]
    %v743 = vld [vmem:[%s737 + $0x14] sm:$0xf]
    %v744 = vld [vmem:[%s737 + $0x18] sm:$0xf]
    %v745 = vld [vmem:[%s737 + $0x1c] sm:$0xf]
    %v746 = vld [vmem:[%s737 + $0x20] sm:$0xf]
    %v747 = vld [vmem:[%s737 + $0x24] sm:$0xf]
    %v748 = vld [vmem:[%s737 + $0x28] sm:$0xf]
    %v749 = vld [vmem:[%s737 + $0x2c] sm:$0xf]
    %v750 = vld [vmem:[%s737 + $0x30] sm:$0xf]
    %v751 = vld [vmem:[%s737 + $0x34] sm:$0xf]
    %v752 = vld [vmem:[%s737 + $0x38] sm:$0xf]
    %v753 = vld [vmem:[%s737 + $0x3c] sm:$0xf]
    %s754 = scalar_lea.vmem %s5, 2
    %v755 = vld [vmem:[%s754] sm:$0x1]
    %v757 = vperm.slane %v755, 0
    %v775 = vunpack.c.l.b16 %v738
    %v776 = vunpack.c.l.b16 %v739
    %v777 = vunpack.c.l.b16 %v740
    %v778 = vunpack.c.l.b16 %v741
    %v779 = vunpack.c.l.b16 %v742
    %v780 = vunpack.c.l.b16 %v743
    %v781 = vunpack.c.l.b16 %v744
    %v782 = vunpack.c.l.b16 %v745
    %v783 = vunpack.c.l.b16 %v746
    %v784 = vunpack.c.l.b16 %v747
    %v785 = vunpack.c.l.b16 %v748
    %v786 = vunpack.c.l.b16 %v749
    %v787 = vunpack.c.l.b16 %v750
    %v788 = vunpack.c.l.b16 %v751
    %v789 = vunpack.c.l.b16 %v752
    %v790 = vunpack.c.l.b16 %v753
    %v791 = vpack.c.b16 %v776, %v775
    %v792 = vpack.c.b16 %v778, %v777
    %v793 = vpack.c.b16 %v780, %v779
    %v794 = vpack.c.b16 %v782, %v781
    %v795 = vpack.c.b16 %v784, %v783
    %v796 = vpack.c.b16 %v786, %v785
    %v797 = vpack.c.b16 %v788, %v787
    %v798 = vpack.c.b16 %v790, %v789
    %807 = vmatpush.bf16.msra.mxu0 %v798
    %808 = vmatpush.bf16.msra.mxu0 %v797
    %809 = vmatpush.bf16.msra.mxu0 %v796
    %810 = vmatpush.bf16.msra.mxu0 %v795
    %811 = vmatpush.bf16.msra.mxu0 %v794
    %812 = vmatpush.bf16.msra.mxu0 %v793
    %813 = vmatpush.bf16.msra.mxu0 %v792
    %814 = vmatpush.bf16.msra.mxu0 %v791
    %815 = vmatmul.bf16.gmra.mxu0 %v721
    %v816 = vpop.f32.mrf.mxu0
    %v817 = vadd.f32 %v757, %v816
    %v818 = vpop.f32.mrf.mxu0
    %v819 = vadd.f32 %v757, %v818
    %820 = vmatmul.bf16.gmra.mxu0 %v722
    %v821 = vpop.f32.mrf.mxu0
    %v822 = vadd.f32 %v757, %v821
    %v823 = vpop.f32.mrf.mxu0
    %v824 = vadd.f32 %v757, %v823
    %825 = vmatmul.bf16.gmra.mxu0 %v723
    %v826 = vpop.f32.mrf.mxu0
    %v827 = vadd.f32 %v757, %v826
    %v828 = vpop.f32.mrf.mxu0
    %v829 = vadd.f32 %v757, %v828
    %830 = vmatmul.bf16.gmra.mxu0 %v724
    %v831 = vpop.f32.mrf.mxu0
    %v832 = vadd.f32 %v757, %v831
    %v833 = vpop.f32.mrf.mxu0
    %v834 = vadd.f32 %v757, %v833
    %835 = vmatmul.bf16.gmra.mxu0 %v725
    %v836 = vpop.f32.mrf.mxu0
    %v837 = vadd.f32 %v757, %v836
    %v838 = vpop.f32.mrf.mxu0
    %v839 = vadd.f32 %v757, %v838
    %840 = vmatmul.bf16.gmra.mxu0 %v726
    %v841 = vpop.f32.mrf.mxu0
    %v842 = vadd.f32 %v757, %v841
    %v843 = vpop.f32.mrf.mxu0
    %v844 = vadd.f32 %v757, %v843
    %845 = vmatmul.bf16.gmra.mxu0 %v727
    %v846 = vpop.f32.mrf.mxu0
    %v847 = vadd.f32 %v757, %v846
    %v848 = vpop.f32.mrf.mxu0
    %v849 = vadd.f32 %v757, %v848
    %850 = vmatmul.bf16.gmra.mxu0 %v728
    %v851 = vpop.f32.mrf.mxu0
    %v852 = vadd.f32 %v757, %v851
    %v853 = vpop.f32.mrf.mxu0
    %v854 = vadd.f32 %v757, %v853
    %855 = vmatmul.bf16.gmra.mxu0 %v729
    %v856 = vpop.f32.mrf.mxu0
    %v857 = vadd.f32 %v757, %v856
    %v858 = vpop.f32.mrf.mxu0
    %v859 = vadd.f32 %v757, %v858
    %860 = vmatmul.bf16.gmra.mxu0 %v730
    %v861 = vpop.f32.mrf.mxu0
    %v862 = vadd.f32 %v757, %v861
    %v863 = vpop.f32.mrf.mxu0
    %v864 = vadd.f32 %v757, %v863
    %865 = vmatmul.bf16.gmra.mxu0 %v731
    %v866 = vpop.f32.mrf.mxu0
    %v867 = vadd.f32 %v757, %v866
    %v868 = vpop.f32.mrf.mxu0
    %v869 = vadd.f32 %v757, %v868
    %870 = vmatmul.bf16.gmra.mxu0 %v732
    %v871 = vpop.f32.mrf.mxu0
    %v872 = vadd.f32 %v757, %v871
    %v873 = vpop.f32.mrf.mxu0
    %v874 = vadd.f32 %v757, %v873
    %875 = vmatmul.bf16.gmra.mxu0 %v733
    %v876 = vpop.f32.mrf.mxu0
    %v877 = vadd.f32 %v757, %v876
    %v878 = vpop.f32.mrf.mxu0
    %v879 = vadd.f32 %v757, %v878
    %880 = vmatmul.bf16.gmra.mxu0 %v734
    %v881 = vpop.f32.mrf.mxu0
    %v882 = vadd.f32 %v757, %v881
    %v883 = vpop.f32.mrf.mxu0
    %v884 = vadd.f32 %v757, %v883
    %885 = vmatmul.bf16.gmra.mxu0 %v735
    %v886 = vpop.f32.mrf.mxu0
    %v887 = vadd.f32 %v757, %v886
    %v888 = vpop.f32.mrf.mxu0
    %v889 = vadd.f32 %v757, %v888
    %890 = vmatmul.bf16.gmra.mxu0 %v736
    %v891 = vpop.f32.mrf.mxu0
    %v892 = vadd.f32 %v757, %v891
    %v893 = vpop.f32.mrf.mxu0
    %v894 = vadd.f32 %v757, %v893
    %895 = vdwg.mxu0
    %v896 = vmax.f32 %v817, 0.0
    %v897 = vmax.f32 %v819, 0.0
    %v898 = vmax.f32 %v822, 0.0
    %v899 = vmax.f32 %v824, 0.0
    %v900 = vmax.f32 %v827, 0.0
    %v901 = vmax.f32 %v829, 0.0
    %v902 = vmax.f32 %v832, 0.0
    %v903 = vmax.f32 %v834, 0.0
    %v904 = vmax.f32 %v837, 0.0
    %v905 = vmax.f32 %v839, 0.0
    %v906 = vmax.f32 %v842, 0.0
    %v907 = vmax.f32 %v844, 0.0
    %v908 = vmax.f32 %v847, 0.0
    %v909 = vmax.f32 %v849, 0.0
    %v910 = vmax.f32 %v852, 0.0
    %v911 = vmax.f32 %v854, 0.0
    %v912 = vmax.f32 %v857, 0.0
    %v913 = vmax.f32 %v859, 0.0
    %v914 = vmax.f32 %v862, 0.0
    %v915 = vmax.f32 %v864, 0.0
    %v916 = vmax.f32 %v867, 0.0
    %v917 = vmax.f32 %v869, 0.0
    %v918 = vmax.f32 %v872, 0.0
    %v919 = vmax.f32 %v874, 0.0
    %v920 = vmax.f32 %v877, 0.0
    %v921 = vmax.f32 %v879, 0.0
    %v922 = vmax.f32 %v882, 0.0
    %v923 = vmax.f32 %v884, 0.0
    %v924 = vmax.f32 %v887, 0.0
    %v925 = vmax.f32 %v889, 0.0
    %v926 = vmax.f32 %v892, 0.0
    %v927 = vmax.f32 %v894, 0.0
    %v928 = vpack.c.bf16 %v897, %v896
    %v929 = vpack.c.bf16 %v899, %v898
    %v930 = vpack.c.bf16 %v901, %v900
    %v931 = vpack.c.bf16 %v903, %v902
    %v932 = vpack.c.bf16 %v905, %v904
    %v933 = vpack.c.bf16 %v907, %v906
    %v934 = vpack.c.bf16 %v909, %v908
    %v935 = vpack.c.bf16 %v911, %v910
    %v936 = vpack.c.bf16 %v913, %v912
    %v937 = vpack.c.bf16 %v915, %v914
    %v938 = vpack.c.bf16 %v917, %v916
    %v939 = vpack.c.bf16 %v919, %v918
    %v940 = vpack.c.bf16 %v921, %v920
    %v941 = vpack.c.bf16 %v923, %v922
    %v942 = vpack.c.bf16 %v925, %v924
    %v943 = vpack.c.bf16 %v927, %v926
    %s944 = scalar_lea.vmem %s4, 192
    %v945 = vld [vmem:[%s944] sm:$0xf]
    %v946 = vld [vmem:[%s944 + $0x4] sm:$0xf]
    %v947 = vld [vmem:[%s944 + $0x8] sm:$0xf]
    %v948 = vld [vmem:[%s944 + $0xc] sm:$0xf]
    %v949 = vld [vmem:[%s944 + $0x10] sm:$0xf]
    %v950 = vld [vmem:[%s944 + $0x14] sm:$0xf]
    %v951 = vld [vmem:[%s944 + $0x18] sm:$0xf]
    %v952 = vld [vmem:[%s944 + $0x1c] sm:$0xf]
    %v953 = vld [vmem:[%s944 + $0x20] sm:$0xf]
    %v954 = vld [vmem:[%s944 + $0x24] sm:$0xf]
    %v955 = vld [vmem:[%s944 + $0x28] sm:$0xf]
    %v956 = vld [vmem:[%s944 + $0x2c] sm:$0xf]
    %v957 = vld [vmem:[%s944 + $0x30] sm:$0xf]
    %v958 = vld [vmem:[%s944 + $0x34] sm:$0xf]
    %v959 = vld [vmem:[%s944 + $0x38] sm:$0xf]
    %v960 = vld [vmem:[%s944 + $0x3c] sm:$0xf]
    %s961 = scalar_lea.vmem %s5, 3
    %v962 = vld [vmem:[%s961] sm:$0x1]
    %v964 = vperm.slane %v962, 0
    %v982 = vunpack.c.l.b16 %v945
    %v983 = vunpack.c.l.b16 %v946
    %v984 = vunpack.c.l.b16 %v947
    %v985 = vunpack.c.l.b16 %v948
    %v986 = vunpack.c.l.b16 %v949
    %v987 = vunpack.c.l.b16 %v950
    %v988 = vunpack.c.l.b16 %v951
    %v989 = vunpack.c.l.b16 %v952
    %v990 = vunpack.c.l.b16 %v953
    %v991 = vunpack.c.l.b16 %v954
    %v992 = vunpack.c.l.b16 %v955
    %v993 = vunpack.c.l.b16 %v956
    %v994 = vunpack.c.l.b16 %v957
    %v995 = vunpack.c.l.b16 %v958
    %v996 = vunpack.c.l.b16 %v959
    %v997 = vunpack.c.l.b16 %v960
    %v998 = vpack.c.b16 %v983, %v982
    %v999 = vpack.c.b16 %v985, %v984
    %v1000 = vpack.c.b16 %v987, %v986
    %v1001 = vpack.c.b16 %v989, %v988
    %v1002 = vpack.c.b16 %v991, %v990
    %v1003 = vpack.c.b16 %v993, %v992
    %v1004 = vpack.c.b16 %v995, %v994
    %v1005 = vpack.c.b16 %v997, %v996
    %1014 = vmatpush.bf16.msra.mxu0 %v1005
    %1015 = vmatpush.bf16.msra.mxu0 %v1004
    %1016 = vmatpush.bf16.msra.mxu0 %v1003
    %1017 = vmatpush.bf16.msra.mxu0 %v1002
    %1018 = vmatpush.bf16.msra.mxu0 %v1001
    %1019 = vmatpush.bf16.msra.mxu0 %v1000
    %1020 = vmatpush.bf16.msra.mxu0 %v999
    %1021 = vmatpush.bf16.msra.mxu0 %v998
    %1022 = vmatmul.bf16.gmra.mxu0 %v928
    %v1023 = vpop.f32.mrf.mxu0
    %v1024 = vadd.f32 %v964, %v1023
    %v1025 = vpop.f32.mrf.mxu0
    %v1026 = vadd.f32 %v964, %v1025
    %1027 = vmatmul.bf16.gmra.mxu0 %v929
    %v1028 = vpop.f32.mrf.mxu0
    %v1029 = vadd.f32 %v964, %v1028
    %v1030 = vpop.f32.mrf.mxu0
    %v1031 = vadd.f32 %v964, %v1030
    %1032 = vmatmul.bf16.gmra.mxu0 %v930
    %v1033 = vpop.f32.mrf.mxu0
    %v1034 = vadd.f32 %v964, %v1033
    %v1035 = vpop.f32.mrf.mxu0
    %v1036 = vadd.f32 %v964, %v1035
    %1037 = vmatmul.bf16.gmra.mxu0 %v931
    %v1038 = vpop.f32.mrf.mxu0
    %v1039 = vadd.f32 %v964, %v1038
    %v1040 = vpop.f32.mrf.mxu0
    %v1041 = vadd.f32 %v964, %v1040
    %1042 = vmatmul.bf16.gmra.mxu0 %v932
    %v1043 = vpop.f32.mrf.mxu0
    %v1044 = vadd.f32 %v964, %v1043
    %v1045 = vpop.f32.mrf.mxu0
    %v1046 = vadd.f32 %v964, %v1045
    %1047 = vmatmul.bf16.gmra.mxu0 %v933
    %v1048 = vpop.f32.mrf.mxu0
    %v1049 = vadd.f32 %v964, %v1048
    %v1050 = vpop.f32.mrf.mxu0
    %v1051 = vadd.f32 %v964, %v1050
    %1052 = vmatmul.bf16.gmra.mxu0 %v934
    %v1053 = vpop.f32.mrf.mxu0
    %v1054 = vadd.f32 %v964, %v1053
    %v1055 = vpop.f32.mrf.mxu0
    %v1056 = vadd.f32 %v964, %v1055
    %1057 = vmatmul.bf16.gmra.mxu0 %v935
    %v1058 = vpop.f32.mrf.mxu0
    %v1059 = vadd.f32 %v964, %v1058
    %v1060 = vpop.f32.mrf.mxu0
    %v1061 = vadd.f32 %v964, %v1060
    %1062 = vmatmul.bf16.gmra.mxu0 %v936
    %v1063 = vpop.f32.mrf.mxu0
    %v1064 = vadd.f32 %v964, %v1063
    %v1065 = vpop.f32.mrf.mxu0
    %v1066 = vadd.f32 %v964, %v1065
    %1067 = vmatmul.bf16.gmra.mxu0 %v937
    %v1068 = vpop.f32.mrf.mxu0
    %v1069 = vadd.f32 %v964, %v1068
    %v1070 = vpop.f32.mrf.mxu0
    %v1071 = vadd.f32 %v964, %v1070
    %1072 = vmatmul.bf16.gmra.mxu0 %v938
    %v1073 = vpop.f32.mrf.mxu0
    %v1074 = vadd.f32 %v964, %v1073
    %v1075 = vpop.f32.mrf.mxu0
    %v1076 = vadd.f32 %v964, %v1075
    %1077 = vmatmul.bf16.gmra.mxu0 %v939
    %v1078 = vpop.f32.mrf.mxu0
    %v1079 = vadd.f32 %v964, %v1078
    %v1080 = vpop.f32.mrf.mxu0
    %v1081 = vadd.f32 %v964, %v1080
    %1082 = vmatmul.bf16.gmra.mxu0 %v940
    %v1083 = vpop.f32.mrf.mxu0
    %v1084 = vadd.f32 %v964, %v1083
    %v1085 = vpop.f32.mrf.mxu0
    %v1086 = vadd.f32 %v964, %v1085
    %1087 = vmatmul.bf16.gmra.mxu0 %v941
    %v1088 = vpop.f32.mrf.mxu0
    %v1089 = vadd.f32 %v964, %v1088
    %v1090 = vpop.f32.mrf.mxu0
    %v1091 = vadd.f32 %v964, %v1090
    %1092 = vmatmul.bf16.gmra.mxu0 %v942
    %v1093 = vpop.f32.mrf.mxu0
    %v1094 = vadd.f32 %v964, %v1093
    %v1095 = vpop.f32.mrf.mxu0
    %v1096 = vadd.f32 %v964, %v1095
    %1097 = vmatmul.bf16.gmra.mxu0 %v943
    %v1098 = vpop.f32.mrf.mxu0
    %v1099 = vadd.f32 %v964, %v1098
    %v1100 = vpop.f32.mrf.mxu0
    %v1101 = vadd.f32 %v964, %v1100
    %1102 = vdwg.mxu0
    %v1103 = vmax.f32 %v1024, 0.0
    %v1104 = vmax.f32 %v1026, 0.0
    %v1105 = vmax.f32 %v1029, 0.0
    %v1106 = vmax.f32 %v1031, 0.0
    %v1107 = vmax.f32 %v1034, 0.0
    %v1108 = vmax.f32 %v1036, 0.0
    %v1109 = vmax.f32 %v1039, 0.0
    %v1110 = vmax.f32 %v1041, 0.0
    %v1111 = vmax.f32 %v1044, 0.0
    %v1112 = vmax.f32 %v1046, 0.0
    %v1113 = vmax.f32 %v1049, 0.0
    %v1114 = vmax.f32 %v1051, 0.0
    %v1115 = vmax.f32 %v1054, 0.0
    %v1116 = vmax.f32 %v1056, 0.0
    %v1117 = vmax.f32 %v1059, 0.0
    %v1118 = vmax.f32 %v1061, 0.0
    %v1119 = vmax.f32 %v1064, 0.0
    %v1120 = vmax.f32 %v1066, 0.0
    %v1121 = vmax.f32 %v1069, 0.0
    %v1122 = vmax.f32 %v1071, 0.0
    %v1123 = vmax.f32 %v1074, 0.0
    %v1124 = vmax.f32 %v1076, 0.0
    %v1125 = vmax.f32 %v1079, 0.0
    %v1126 = vmax.f32 %v1081, 0.0
    %v1127 = vmax.f32 %v1084, 0.0
    %v1128 = vmax.f32 %v1086, 0.0
    %v1129 = vmax.f32 %v1089, 0.0
    %v1130 = vmax.f32 %v1091, 0.0
    %v1131 = vmax.f32 %v1094, 0.0
    %v1132 = vmax.f32 %v1096, 0.0
    %v1133 = vmax.f32 %v1099, 0.0
    %v1134 = vmax.f32 %v1101, 0.0
    %v1135 = vld [vmem:[%s1] sm:$0xff]
    %v1136 = vpack.c.bf16 %v1104, %v1103
    %v1137 = vpack.c.bf16 %v1106, %v1105
    %v1138 = vpack.c.bf16 %v1108, %v1107
    %v1139 = vpack.c.bf16 %v1110, %v1109
    %v1140 = vpack.c.bf16 %v1112, %v1111
    %v1141 = vpack.c.bf16 %v1114, %v1113
    %v1142 = vpack.c.bf16 %v1116, %v1115
    %v1143 = vpack.c.bf16 %v1118, %v1117
    %v1144 = vpack.c.bf16 %v1120, %v1119
    %v1145 = vpack.c.bf16 %v1122, %v1121
    %v1146 = vpack.c.bf16 %v1124, %v1123
    %v1147 = vpack.c.bf16 %v1126, %v1125
    %v1148 = vpack.c.bf16 %v1128, %v1127
    %v1149 = vpack.c.bf16 %v1130, %v1129
    %v1150 = vpack.c.bf16 %v1132, %v1131
    %v1151 = vpack.c.bf16 %v1134, %v1133
    %v1153 = vunpack.c.l.b16 %v1135
    %v1154 = vunpack.c.h.b16 %v1135
    %v1155 = vpack.c.b16 %v1153, %v1153
    %v1156 = vpack.c.b16 %v1154, %v1154
    %1159 = vmatpush.bf16.msra.mxu0 %v1143
    %1160 = vmatpush.bf16.msra.mxu0 %v1142
    %1161 = vmatpush.bf16.msra.mxu0 %v1141
    %1162 = vmatpush.bf16.msra.mxu0 %v1140
    %1163 = vmatpush.bf16.msra.mxu0 %v1139
    %1164 = vmatpush.bf16.msra.mxu0 %v1138
    %1165 = vmatpush.bf16.msra.mxu0 %v1137
    %1166 = vmatpush.bf16.msra.mxu0 %v1136
    %1167 = vmatmul.bf16.gmra.mxu0 %v1155
    %v1168 = vpop.f32.mrf.mxu0
    %v1169 = vadd.f32 0.0, %v1168
    %v1170 = vpop.f32.mrf.mxu0
    %1171 = vdwg.mxu0
    %1172 = vmatpush.bf16.msra.mxu0 %v1151
    %1173 = vmatpush.bf16.msra.mxu0 %v1150
    %1174 = vmatpush.bf16.msra.mxu0 %v1149
    %1175 = vmatpush.bf16.msra.mxu0 %v1148
    %1176 = vmatpush.bf16.msra.mxu0 %v1147
    %1177 = vmatpush.bf16.msra.mxu0 %v1146
    %1178 = vmatpush.bf16.msra.mxu0 %v1145
    %1179 = vmatpush.bf16.msra.mxu0 %v1144
    %1180 = vmatmul.bf16.gmra.mxu0 %v1156
    %v1181 = vpop.f32.mrf.mxu0
    %v1182 = vadd.f32 %v1169, %v1181
    %v1183 = vpop.f32.mrf.mxu0
    %1184 = vdwg.mxu0
    %1185 = vst [vmem:[#allocation2] sm:$0xff] %v1182
    // Predicated region
    $region26: #{cnn_net1_forward.1} parent=1 // pred_check
      _
    $region27: #{cnn_net1_forward.1} parent=1 // pred_check_branch
      %1187 = sbr.rel (0) target = $region29
    $region28: #{cnn_net1_forward.1} parent=1 // pred_region
      %1189 = vsyncadd [#allocation3], 0
      %s1191 = sshll.u32 [#allocation2], 4
      %s1192 = int_to_ptr.vmem [resolvable:$true] %s1191
      %s1193 = sshll.u32 %s6, 4
      %s1194 = int_to_ptr.hbm [resolvable:$true] %s1193
      %1196 = dma.vmem_to_hbm [thread:$0]  %s1192, 128, %s1194, [#allocation3]
    $region29: #{cnn_net1_forward.1} parent=1 // pred_fallthru
      _
    // Predicated region
    $region30: #{cnn_net1_forward.1} parent=1 // pred_check
      _
    $region31: #{cnn_net1_forward.1} parent=1 // pred_check_branch
      %1198 = sbr.rel (0) target = $region33
    $region32: #{cnn_net1_forward.1} parent=1 // pred_region
      %1200 = dma.done [#allocation3], 128
    $region33: #{cnn_net1_forward.1} parent=1 // pred_fallthru
      _
    %1201 = vsyncpa [#allocation3], 1

</llo_original>
